<compile_context>
chip_gen: v7x
topology: tpu7x:2x2x1
jax: 0.10.0
libtpu: 0.0.40
codegen_flags: <defaults>
</compile_context>

<pallas_src>
import functools
import math

import jax
import jax.numpy as jnp
from jax.experimental import pallas as pl
from jax.experimental.pallas import tpu as pltpu


def _device_kind() -> str:
    try:
        return jax.devices()[0].device_kind.lower()
    except Exception:  # pragma: no cover - defensive; fall back to safe defaults
        return ""


def mha_kernel(x_ref, wqkv_ref, wagg_ref, o_ref, *, num_head, head_dim):
    nb, S, D = x_ref.shape                      # block batch, seq, feature
    H, d = num_head, head_dim
    Opad = o_ref.shape[-1]                      # lane-dense output width
    G = H * nb                                  # head-batched dim
    cdt = wqkv_ref.dtype                        # MXU operand dtype (bf16 or f32)

    # --- Fused q/k/v projection: one (nb*S, D) @ (D, 3D) matmul ------------
    x = x_ref[...].reshape(nb * S, D).astype(cdt)
    qkv = jnp.dot(x, wqkv_ref[...], preferred_element_type=jnp.float32)
    qkv = qkv.reshape(nb, S, 3 * D)             # sublane-aligned split (S == 8)

    def gather_heads(lane_off):
        # (H, nb, S, d) via lane slices + leading-dim stack (no sublane/major
        # transpose — Mosaic-friendly at these tiny packed shapes).
        hs = jnp.stack(
            [qkv[:, :, lane_off + h * d: lane_off + (h + 1) * d]
             for h in range(H)], axis=0)
        return hs.reshape(G, S, d).astype(cdt)

    q = gather_heads(0)                         # 1/sqrt(d) folded into Q weights
    k = gather_heads(D)
    v = gather_heads(2 * D)

    # --- Head-batched attention core (batch index g = head*nb + batch) ------
    s = jnp.einsum('gsd,gtd->gst', q, k, preferred_element_type=jnp.float32)
    s = s - jnp.max(s, axis=-1, keepdims=True)
    p = jnp.exp(s)
    p = p * pl.reciprocal(jnp.sum(p, axis=-1, keepdims=True), approx=True)
    ho = jnp.einsum('gst,gtd->gsd', p.astype(cdt), v,
                    preferred_element_type=jnp.float32)          # (G, S, d)

    # --- Lane-concat heads + ONE aggregation matmul --------------------------
    ho = ho.reshape(H, nb, S, d)
    slab = jnp.concatenate([ho[h] for h in range(H)], axis=-1)   # (nb, S, D)
    slab = slab.reshape(nb * S, D).astype(cdt)
    out = jnp.dot(slab, wagg_ref[...], preferred_element_type=jnp.float32)
    o_ref[...] = out.reshape(nb, S, Opad).astype(o_ref.dtype)


def prepare_mha_params(wq, wk, wv, wagg_t, *, compute_dtype=jnp.bfloat16,
                       lane_pad=128):
    """One-time weight prep — hoisted out of the per-call path.

    wq/wk/wv: [H, d, d] per-head Linear weights (stored transposed for x @ W).
    wagg_t:   [H, d, O] aggregation Linear weight, transposed and split per head.
    Returns (wqkv [D, 3D] block-diagonal with scale folded into Q,
             wagg  [D, Opad] full aggregation matrix, zero-padded to 128 lanes).
    """
    H, d, _ = wq.shape
    D = H * d
    O = wagg_t.shape[-1]
    scale = 1.0 / math.sqrt(d)

    def block_diag(w):                      # (H, d, d) -> (D, D)
        m = jnp.zeros((D, D), w.dtype)
        for h in range(H):
            m = m.at[h * d:(h + 1) * d, h * d:(h + 1) * d].set(w[h])
        return m

    wqkv = jnp.concatenate(
        [block_diag(wq) * scale, block_diag(wk), block_diag(wv)], axis=-1)
    Opad = pl.cdiv(O, lane_pad) * lane_pad
    wagg = jnp.zeros((D, Opad), wagg_t.dtype).at[:, :O].set(wagg_t.reshape(D, O))
    return wqkv.astype(compute_dtype), wagg.astype(compute_dtype)


def multi_head_attention(x, wqkv, wagg_pad, *, num_head, output_dim,
                         batch_per_step=None):
    """x: [B, S, D]; wqkv: [D, 3D]; wagg_pad: [D, Opad] (from prepare_mha_params)."""
    B, S, D = x.shape
    d = D // num_head
    Opad = wagg_pad.shape[-1]
    nb = B if batch_per_step is None else batch_per_step
    assert B % nb == 0, "batch_per_step must divide the batch"

    kernel = functools.partial(mha_kernel, num_head=num_head, head_dim=d)
    out = pl.pallas_call(
        kernel,
        out_shape=jax.ShapeDtypeStruct((B, S, Opad), x.dtype),
        grid_spec=pltpu.PrefetchScalarGridSpec(
            num_scalar_prefetch=0,
            grid=(B // nb,),
            in_specs=[
                # x block: lane-contiguous D kept whole; nb batches per step.
                pl.BlockSpec((nb, S, D), lambda b: (b, 0, 0)),
                # Weights: constant index_map -> single DMA, VMEM-resident.
                pl.BlockSpec(wqkv.shape, lambda b: (0, 0)),
                pl.BlockSpec(wagg_pad.shape, lambda b: (0, 0)),
            ],
            out_specs=pl.BlockSpec((nb, S, Opad), lambda b: (b, 0, 0)),
        ),
        compiler_params=pltpu.CompilerParams(
            dimension_semantics=("parallel",)),
    )(x, wqkv, wagg_pad)
    # Kernel stores a lane-dense (…, 128) slab; trim the zero padding outside.
    return out[..., :output_dim]


def reference(x, wq, wk, wv, wagg_t, num_head):
    B, S, D = x.shape
    H = num_head
    d = D // H
    outs = []
    for h in range(H):
        px = x[..., h * d:(h + 1) * d]
        q = px @ wq[h]
        k = px @ wk[h]
        v = px @ wv[h]
        scores = (q @ jnp.swapaxes(k, -1, -2)) / math.sqrt(d)
        p = jax.nn.softmax(scores, axis=-1)
        outs.append(p @ v)
    mid = jnp.concatenate(outs, axis=-1)                    # [B, S, H*d]
    return mid @ wagg_t.reshape(H * d, -1)                  # [B, S, O]


if __name__ == "__main__":
    # Module config: input_dim=32, output_dim=16, num_head=4, divide_input_dim=True
    B, S = 2, 8
    input_dim, output_dim, num_head = 32, 16, 4
    d = input_dim // num_head

    key = jax.random.PRNGKey(0)
    kx, kq, kk, kv, ka = jax.random.split(key, 5)
    x = jax.random.normal(kx, (B, S, input_dim), dtype=jnp.float32)
    # Per-head q/k/v Linear weights (bias-free), stored transposed for x @ W.
    wq = jax.random.normal(kq, (num_head, d, d), dtype=jnp.float32) * 0.1
    wk = jax.random.normal(kk, (num_head, d, d), dtype=jnp.float32) * 0.1
    wv = jax.random.normal(kv, (num_head, d, d), dtype=jnp.float32) * 0.1
    # Aggregation Linear(num_head*d -> output_dim, bias=False), transposed per head.
    wagg_t = (jax.random.normal(ka, (num_head, d, output_dim), dtype=jnp.float32)
              * 0.1)

    kind = _device_kind()
    two_tensorcores = "v7" in kind               # v7x: 2 TCs/chip -> B-parallel grid
    no_bf16_vpu = "v5" in kind                   # v5e: no bf16 VALU path -> stay f32
    compute_dtype = jnp.float32 if no_bf16_vpu else jnp.bfloat16

    # One-time weight prep (hoisted out of the per-call path).
    wqkv, wagg_pad = prepare_mha_params(
        wq, wk, wv, wagg_t, compute_dtype=compute_dtype)

    fwd = jax.jit(functools.partial(
        multi_head_attention, num_head=num_head, output_dim=output_dim,
        batch_per_step=(1 if two_tensorcores else B)))
    out = jax.block_until_ready(fwd(x, wqkv, wagg_pad))

    ref = reference(x, wq, wk, wv, wagg_t, num_head)
    assert out.shape == (B, S, output_dim)
    # Tolerance covers bf16 MXU inputs (f32 accumulation) + approx reciprocal.
    assert jnp.allclose(out, ref, atol=2e-2, rtol=2e-2), "mismatch vs reference"

    print("KERNEL_OK")
</pallas_src>

<mosaic_0001>
module attributes {stable_mosaic.version = 11 : i64} {
  func.func @mha_kernel(%arg0: i32, %arg1: memref<2x8x32xf32, #tpu.memory_space<vmem>>, %arg2: memref<32x96xbf16, #tpu.memory_space<vmem>>, %arg3: memref<32x128xbf16, #tpu.memory_space<vmem>>, %arg4: memref<2x8x128xf32, #tpu.memory_space<vmem>>) attributes {dimension_semantics = [#tpu.dimension_semantics<parallel>], iteration_bounds = array<i64: 1>, scalar_prefetch = 0 : i64, scratch_operands = 0 : i64, tpu.core_type = #tpu.core_type<tc>, window_params = [{transform_indices = @transform_0, window_bounds = array<i64: 2, 8, 32>}, {pipeline_mode = #tpu.pipeline_mode<synchronous>, transform_indices = @transform_1, window_bounds = array<i64: 32, 96>}, {pipeline_mode = #tpu.pipeline_mode<synchronous>, transform_indices = @transform_2, window_bounds = array<i64: 32, 128>}, {transform_indices = @transform_3, window_bounds = array<i64: 2, 8, 128>}]} {
    %c0 = arith.constant 0 : index
    %c0_0 = arith.constant 0 : index
    %c0_1 = arith.constant 0 : index
    %0 = vector.load %arg1[%c0, %c0_0, %c0_1] : memref<2x8x32xf32, #tpu.memory_space<vmem>>, vector<2x8x32xf32>
    %1 = vector.shape_cast %0 : vector<2x8x32xf32> to vector<16x32xf32>
    %2 = arith.truncf %1 : vector<16x32xf32> to vector<16x32xbf16>
    %c0_2 = arith.constant 0 : index
    %c0_3 = arith.constant 0 : index
    %3 = vector.load %arg2[%c0_2, %c0_3] : memref<32x96xbf16, #tpu.memory_space<vmem>>, vector<32x96xbf16>
    %cst = arith.constant dense<0.000000e+00> : vector<16x96xf32>
    %4 = tpu.matmul %2, %3, %cst {dimension_numbers = #tpu.dot_dimension_numbers<[1], [0], [0], [1], [0, 0, 1, 1], [], []>} : vector<16x32xbf16>, vector<32x96xbf16>, vector<16x96xf32> -> vector<16x96xf32>
    %5 = vector.shape_cast %4 : vector<16x96xf32> to vector<2x8x96xf32>
    %6 = vector.extract_strided_slice %5 {offsets = [0, 0, 0], sizes = [2, 8, 8], strides = [1, 1, 1]} : vector<2x8x96xf32> to vector<2x8x8xf32>
    %7 = vector.extract_strided_slice %5 {offsets = [0, 0, 8], sizes = [2, 8, 8], strides = [1, 1, 1]} : vector<2x8x96xf32> to vector<2x8x8xf32>
    %8 = vector.extract_strided_slice %5 {offsets = [0, 0, 16], sizes = [2, 8, 8], strides = [1, 1, 1]} : vector<2x8x96xf32> to vector<2x8x8xf32>
    %9 = vector.extract_strided_slice %5 {offsets = [0, 0, 24], sizes = [2, 8, 8], strides = [1, 1, 1]} : vector<2x8x96xf32> to vector<2x8x8xf32>
    %10 = vector.shape_cast %6 : vector<2x8x8xf32> to vector<1x2x8x8xf32>
    %11 = vector.shape_cast %7 : vector<2x8x8xf32> to vector<1x2x8x8xf32>
    %12 = vector.shape_cast %8 : vector<2x8x8xf32> to vector<1x2x8x8xf32>
    %13 = vector.shape_cast %9 : vector<2x8x8xf32> to vector<1x2x8x8xf32>
    %14 = tpu.concatenate %10, %11, %12, %13 in 0 : vector<1x2x8x8xf32>, vector<1x2x8x8xf32>, vector<1x2x8x8xf32>, vector<1x2x8x8xf32> -> vector<4x2x8x8xf32>
    %15 = vector.shape_cast %14 : vector<4x2x8x8xf32> to vector<8x8x8xf32>
    %16 = arith.truncf %15 : vector<8x8x8xf32> to vector<8x8x8xbf16>
    %17 = vector.extract_strided_slice %5 {offsets = [0, 0, 32], sizes = [2, 8, 8], strides = [1, 1, 1]} : vector<2x8x96xf32> to vector<2x8x8xf32>
    %18 = vector.extract_strided_slice %5 {offsets = [0, 0, 40], sizes = [2, 8, 8], strides = [1, 1, 1]} : vector<2x8x96xf32> to vector<2x8x8xf32>
    %19 = vector.extract_strided_slice %5 {offsets = [0, 0, 48], sizes = [2, 8, 8], strides = [1, 1, 1]} : vector<2x8x96xf32> to vector<2x8x8xf32>
    %20 = vector.extract_strided_slice %5 {offsets = [0, 0, 56], sizes = [2, 8, 8], strides = [1, 1, 1]} : vector<2x8x96xf32> to vector<2x8x8xf32>
    %21 = vector.shape_cast %17 : vector<2x8x8xf32> to vector<1x2x8x8xf32>
    %22 = vector.shape_cast %18 : vector<2x8x8xf32> to vector<1x2x8x8xf32>
    %23 = vector.shape_cast %19 : vector<2x8x8xf32> to vector<1x2x8x8xf32>
    %24 = vector.shape_cast %20 : vector<2x8x8xf32> to vector<1x2x8x8xf32>
    %25 = tpu.concatenate %21, %22, %23, %24 in 0 : vector<1x2x8x8xf32>, vector<1x2x8x8xf32>, vector<1x2x8x8xf32>, vector<1x2x8x8xf32> -> vector<4x2x8x8xf32>
    %26 = vector.shape_cast %25 : vector<4x2x8x8xf32> to vector<8x8x8xf32>
    %27 = arith.truncf %26 : vector<8x8x8xf32> to vector<8x8x8xbf16>
    %28 = vector.extract_strided_slice %5 {offsets = [0, 0, 64], sizes = [2, 8, 8], strides = [1, 1, 1]} : vector<2x8x96xf32> to vector<2x8x8xf32>
    %29 = vector.extract_strided_slice %5 {offsets = [0, 0, 72], sizes = [2, 8, 8], strides = [1, 1, 1]} : vector<2x8x96xf32> to vector<2x8x8xf32>
    %30 = vector.extract_strided_slice %5 {offsets = [0, 0, 80], sizes = [2, 8, 8], strides = [1, 1, 1]} : vector<2x8x96xf32> to vector<2x8x8xf32>
    %31 = vector.extract_strided_slice %5 {offsets = [0, 0, 88], sizes = [2, 8, 8], strides = [1, 1, 1]} : vector<2x8x96xf32> to vector<2x8x8xf32>
    %32 = vector.shape_cast %28 : vector<2x8x8xf32> to vector<1x2x8x8xf32>
    %33 = vector.shape_cast %29 : vector<2x8x8xf32> to vector<1x2x8x8xf32>
    %34 = vector.shape_cast %30 : vector<2x8x8xf32> to vector<1x2x8x8xf32>
    %35 = vector.shape_cast %31 : vector<2x8x8xf32> to vector<1x2x8x8xf32>
    %36 = tpu.concatenate %32, %33, %34, %35 in 0 : vector<1x2x8x8xf32>, vector<1x2x8x8xf32>, vector<1x2x8x8xf32>, vector<1x2x8x8xf32> -> vector<4x2x8x8xf32>
    %37 = vector.shape_cast %36 : vector<4x2x8x8xf32> to vector<8x8x8xf32>
    %38 = arith.truncf %37 : vector<8x8x8xf32> to vector<8x8x8xbf16>
    "tpu.trace_start"() <{level = 10 : i32, message = "gsd,gtd->gst"}> : () -> ()
    %cst_4 = arith.constant dense<0.000000e+00> : vector<8x8x8xf32>
    %39 = tpu.matmul %16, %27, %cst_4 {dimension_numbers = #tpu.dot_dimension_numbers<[2], [2], [1], [1], [0, 0, 0, 1, 1, 1], [0], [0]>} : vector<8x8x8xbf16>, vector<8x8x8xbf16>, vector<8x8x8xf32> -> vector<8x8x8xf32>
    "tpu.trace_stop"() : () -> ()
    %cst_5 = arith.constant dense<0xFF800000> : vector<8x8xf32>
    %40 = vector.multi_reduction <maximumf>, %39, %cst_5 [2] : vector<8x8x8xf32> to vector<8x8xf32>
    %41 = vector.shape_cast %40 : vector<8x8xf32> to vector<8x8x1xf32>
    %42 = vector.broadcast %41 : vector<8x8x1xf32> to vector<8x8x8xf32>
    %43 = arith.subf %39, %42 : vector<8x8x8xf32>
    %44 = math.exp %43 : vector<8x8x8xf32>
    %cst_6 = arith.constant dense<0.000000e+00> : vector<8x8xf32>
    %45 = vector.multi_reduction <add>, %44, %cst_6 [2] : vector<8x8x8xf32> to vector<8x8xf32>
    %46 = vector.shape_cast %45 : vector<8x8xf32> to vector<8x8x1xf32>
    %47 = tpu.reciprocal %46 {approx = true} : vector<8x8x1xf32> -> vector<8x8x1xf32>
    %48 = vector.broadcast %47 : vector<8x8x1xf32> to vector<8x8x8xf32>
    %49 = arith.mulf %44, %48 : vector<8x8x8xf32>
    %50 = arith.truncf %49 : vector<8x8x8xf32> to vector<8x8x8xbf16>
    "tpu.trace_start"() <{level = 10 : i32, message = "gst,gtd->gsd"}> : () -> ()
    %cst_7 = arith.constant dense<0.000000e+00> : vector<8x8x8xf32>
    %51 = tpu.matmul %50, %38, %cst_7 {dimension_numbers = #tpu.dot_dimension_numbers<[2], [1], [1], [2], [0, 0, 0, 1, 1, 2], [0], [0]>} : vector<8x8x8xbf16>, vector<8x8x8xbf16>, vector<8x8x8xf32> -> vector<8x8x8xf32>
    "tpu.trace_stop"() : () -> ()
    %52 = vector.shape_cast %51 : vector<8x8x8xf32> to vector<4x2x8x8xf32>
    %53 = vector.extract_strided_slice %52 {offsets = [0, 0, 0, 0], sizes = [1, 2, 8, 8], strides = [1, 1, 1, 1]} : vector<4x2x8x8xf32> to vector<1x2x8x8xf32>
    %54 = vector.shape_cast %53 : vector<1x2x8x8xf32> to vector<2x8x8xf32>
    %55 = vector.extract_strided_slice %52 {offsets = [1, 0, 0, 0], sizes = [1, 2, 8, 8], strides = [1, 1, 1, 1]} : vector<4x2x8x8xf32> to vector<1x2x8x8xf32>
    %56 = vector.shape_cast %55 : vector<1x2x8x8xf32> to vector<2x8x8xf32>
    %57 = vector.extract_strided_slice %52 {offsets = [2, 0, 0, 0], sizes = [1, 2, 8, 8], strides = [1, 1, 1, 1]} : vector<4x2x8x8xf32> to vector<1x2x8x8xf32>
    %58 = vector.shape_cast %57 : vector<1x2x8x8xf32> to vector<2x8x8xf32>
    %59 = vector.extract_strided_slice %52 {offsets = [3, 0, 0, 0], sizes = [1, 2, 8, 8], strides = [1, 1, 1, 1]} : vector<4x2x8x8xf32> to vector<1x2x8x8xf32>
    %60 = vector.shape_cast %59 : vector<1x2x8x8xf32> to vector<2x8x8xf32>
    %61 = tpu.concatenate %54, %56, %58, %60 in 2 : vector<2x8x8xf32>, vector<2x8x8xf32>, vector<2x8x8xf32>, vector<2x8x8xf32> -> vector<2x8x32xf32>
    %62 = vector.shape_cast %61 : vector<2x8x32xf32> to vector<16x32xf32>
    %63 = arith.truncf %62 : vector<16x32xf32> to vector<16x32xbf16>
    %c0_8 = arith.constant 0 : index
    %c0_9 = arith.constant 0 : index
    %64 = vector.load %arg3[%c0_8, %c0_9] : memref<32x128xbf16, #tpu.memory_space<vmem>>, vector<32x128xbf16>
    %cst_10 = arith.constant dense<0.000000e+00> : vector<16x128xf32>
    %65 = tpu.matmul %63, %64, %cst_10 {dimension_numbers = #tpu.dot_dimension_numbers<[1], [0], [0], [1], [0, 0, 1, 1], [], []>} : vector<16x32xbf16>, vector<32x128xbf16>, vector<16x128xf32> -> vector<16x128xf32>
    %66 = vector.shape_cast %65 : vector<16x128xf32> to vector<2x8x128xf32>
    %c0_11 = arith.constant 0 : index
    %c0_12 = arith.constant 0 : index
    %c0_13 = arith.constant 0 : index
    %67 = vector.load %arg4[%c0_11, %c0_12, %c0_13] : memref<2x8x128xf32, #tpu.memory_space<vmem>>, vector<2x8x128xf32>
    tpu.vector_store %arg4[%c0_11, %c0_12, %c0_13], %66 {strides = array<i32>} : memref<2x8x128xf32, #tpu.memory_space<vmem>>, vector<2x8x128xf32>,
    return
  }
  func.func @transform_0(%arg0: i32) -> (i32, i32, i32) {
    %c0_i32 = arith.constant 0 : i32
    %c0_i32_0 = arith.constant 0 : i32
    %c0_i32_1 = arith.constant 0 : i32
    return %arg0, %c0_i32, %c0_i32_0 : i32, i32, i32
  }
  func.func @transform_1(%arg0: i32) -> (i32, i32) {
    %c0_i32 = arith.constant 0 : i32
    %c0_i32_0 = arith.constant 0 : i32
    %c0_i32_1 = arith.constant 0 : i32
    return %c0_i32, %c0_i32_0 : i32, i32
  }
  func.func @transform_2(%arg0: i32) -> (i32, i32) {
    %c0_i32 = arith.constant 0 : i32
    %c0_i32_0 = arith.constant 0 : i32
    %c0_i32_1 = arith.constant 0 : i32
    return %c0_i32, %c0_i32_0 : i32, i32
  }
  func.func @transform_3(%arg0: i32) -> (i32, i32, i32) {
    %c0_i32 = arith.constant 0 : i32
    %c0_i32_0 = arith.constant 0 : i32
    %c0_i32_1 = arith.constant 0 : i32
    return %arg0, %c0_i32, %c0_i32_0 : i32, i32, i32
  }
}

</mosaic_0001>

<llo_original>
// kernel: multi_head_attention.1
$region0: #{multi_head_attention.1}
  #allocation0 [shape = 'u32[]', space=smem, size = 0x4, offset = 0x4, fixed_abs, tag = 'smem constant byte address 0x4 - core index']
  #allocation1 [shape = 'u32[144,128]{1,0:T(1,128)}', space=vmem, size = 0x12000, scoped, tag = 'internal scratch']
  %s0 = inlined_call_operand.hbm [shape: f32[2,8,32], index: 0, kind: input, shape index: {}]
  %s1 = inlined_call_operand.hbm [shape: bf16[32,96], index: 1, kind: input, shape index: {}]
  %s2 = inlined_call_operand.hbm [shape: bf16[32,128], index: 2, kind: input, shape index: {}]
  %s3 = inlined_call_operand.hbm [shape: f32[2,8,128], index: 3, kind: output, shape index: {}]
  %s4 = sld [smem:[#allocation0]]
  $region34: #{multi_head_attention.1} parent=0
    _
  %s6 = ssub.s32 1, %s4
  %s7 = scalar_select 0, %s6, %s4
  $region1: #{multi_head_attention.1} parent=0
    #allocation2 [shape = 'u8[8192]{0}', space=vmem, size = 0x2000, scoped, tag = 'input window, operand 0, single buffered']
    #allocation3 [shape = 's32[1]{0}', space=sflag, size = 0x4, scoped, tag = 'scoped memory for multi_head_attention.1']
    #allocation4 [shape = 's32[1]{0}', space=sflag, size = 0x4, scoped, tag = 'scoped memory for multi_head_attention.1']
    #allocation5 [shape = 'u8[8192]{0}', space=vmem, size = 0x2000, scoped, tag = 'input window, operand 1, single buffered']
    #allocation6 [shape = 's32[1]{0}', space=sflag, size = 0x4, scoped, tag = 'scoped memory for multi_head_attention.1']
    #allocation7 [shape = 'u8[8192]{0}', space=vmem, size = 0x2000, scoped, tag = 'input window, operand 2, single buffered']
    #allocation8 [shape = 'u8[8192]{0}', space=vmem, size = 0x2000, scoped, tag = 'output window, operand 0, single buffered']
    %8 = vsyncpa [#allocation3], 0
    %9 = vsyncpa [#allocation6], 0
    %10 = vsyncpa [#allocation4], 0
    // Predicated region
    $region2: #{multi_head_attention.1} parent=1 // pred_check
      _
    $region3: #{multi_head_attention.1} parent=1 // pred_check_branch
      %12 = sbr.rel (0) target = $region5
    $region4: #{multi_head_attention.1} parent=1 // pred_region
      %s14 = ssub.s32 256, 256
      %15 = vsyncadd [#allocation3], %s14
      %s16 = sshll.u32 [#allocation2], 4
      %s17 = int_to_ptr.vmem [resolvable:$true] %s16
      %22 = dma.hbm_to_vmem [thread:$0]  %s0, 256, %s17, [#allocation3], 128, 128, 8
    $region5: #{multi_head_attention.1} parent=1 // pred_fallthru
      _
    // Predicated region
    $region6: #{multi_head_attention.1} parent=1 // pred_check
      _
    $region7: #{multi_head_attention.1} parent=1 // pred_check_branch
      %24 = sbr.rel (0) target = $region9
    $region8: #{multi_head_attention.1} parent=1 // pred_region
      %s26 = ssub.s32 256, 256
      %27 = vsyncadd [#allocation6], %s26
      %s28 = sshll.u32 [#allocation5], 4
      %s29 = int_to_ptr.vmem [resolvable:$true] %s28
      %34 = dma.hbm_to_vmem [thread:$0]  %s1, 256, %s29, [#allocation6], 64, 64, 4
    $region9: #{multi_head_attention.1} parent=1 // pred_fallthru
      _
    // Predicated region
    $region10: #{multi_head_attention.1} parent=1 // pred_check
      _
    $region11: #{multi_head_attention.1} parent=1 // pred_check_branch
      %36 = sbr.rel (0) target = $region13
    $region12: #{multi_head_attention.1} parent=1 // pred_region
      %s38 = ssub.s32 256, 256
      %39 = vsyncadd [#allocation6], %s38
      %s40 = sshll.u32 [#allocation7], 4
      %s41 = int_to_ptr.vmem [resolvable:$true] %s40
      %46 = dma.hbm_to_vmem [thread:$0]  %s2, 256, %s41, [#allocation6], 64, 64, 4
    $region13: #{multi_head_attention.1} parent=1 // pred_fallthru
      _
    // Predicated region
    $region14: #{multi_head_attention.1} parent=1 // pred_check
      _
    $region15: #{multi_head_attention.1} parent=1 // pred_check_branch
      %48 = sbr.rel (0) target = $region17
    $region16: #{multi_head_attention.1} parent=1 // pred_region
      %49 = dma.done [#allocation3], 256
    $region17: #{multi_head_attention.1} parent=1 // pred_fallthru
      _
    // Predicated region
    $region18: #{multi_head_attention.1} parent=1 // pred_check
      _
    $region19: #{multi_head_attention.1} parent=1 // pred_check_branch
      %51 = sbr.rel (0) target = $region21
    $region20: #{multi_head_attention.1} parent=1 // pred_region
      %52 = dma.done [#allocation6], 256
    $region21: #{multi_head_attention.1} parent=1 // pred_fallthru
      _
    // Predicated region
    $region22: #{multi_head_attention.1} parent=1 // pred_check
      _
    $region23: #{multi_head_attention.1} parent=1 // pred_check_branch
      %54 = sbr.rel (0) target = $region25
    $region24: #{multi_head_attention.1} parent=1 // pred_region
      %55 = dma.done [#allocation6], 256
    $region25: #{multi_head_attention.1} parent=1 // pred_fallthru
      _
    %v57 = vld [vmem:[#allocation2] sm:$0xff]
    %v58 = vld [vmem:[#allocation2 + $0x8] sm:$0xff]
    %v59 = vpack.c.bf16 %v58, %v57
    %v60 = vld [vmem:[#allocation5] sm:$0xf]
    %v61 = vld [vmem:[#allocation5 + $0x4] sm:$0xf]
    %v62 = vld [vmem:[#allocation5 + $0x8] sm:$0xf]
    %v63 = vld [vmem:[#allocation5 + $0xc] sm:$0xf]
    %v68 = vunpack.c.l.b16 %v60
    %v69 = vunpack.c.l.b16 %v61
    %v70 = vunpack.c.l.b16 %v62
    %v71 = vunpack.c.l.b16 %v63
    %v72 = vpack.c.b16 %v69, %v68
    %v73 = vpack.c.b16 %v71, %v70
    %vm76 = vcmask 261120
    %v78 = vsel %vm76, %v59, 0
    %80 = vmatprep.subr.bf16.mxu0 0
    %81 = vmatpush1.bf16.msra.mxu0 %v72
    %82 = vmatprep.subr.bf16.mxu0 0
    %83 = vmatpush1.bf16.msra.mxu0 %v73
    %84 = vmatprep.subr.bf16.mxu0 0
    %85 = vmatpush1.bf16.msra.mxu0 0
    %86 = vmatprep.subr.bf16.mxu0 0
    %87 = vmatpush1.bf16.msra.mxu0 0
    %88 = vmatprep.subr.bf16.mxu0 0
    %89 = vmatpush1.bf16.msra.mxu0 0
    %90 = vmatprep.subr.bf16.mxu0 0
    %91 = vmatpush1.bf16.msra.mxu0 0
    %92 = vmatprep.subr.bf16.mxu0 0
    %93 = vmatpush1.bf16.msra.mxu0 0
    %94 = vmatprep.subr.bf16.mxu0 0
    %95 = vmatpush1.bf16.msra.mxu0 0
    %96 = vmatprep.subr.bf16.mxu0 0
    %97 = vmatpush1.bf16.msra.mxu0 0
    %98 = vmatprep.subr.bf16.mxu0 0
    %99 = vmatpush1.bf16.msra.mxu0 0
    %100 = vmatprep.subr.bf16.mxu0 0
    %101 = vmatpush1.bf16.msra.mxu0 0
    %102 = vmatprep.subr.bf16.mxu0 0
    %103 = vmatpush1.bf16.msra.mxu0 0
    %104 = vmatprep.subr.bf16.mxu0 0
    %105 = vmatpush1.bf16.msra.mxu0 0
    %106 = vmatprep.subr.bf16.mxu0 0
    %107 = vmatpush1.bf16.msra.mxu0 0
    %108 = vmatprep.subr.bf16.mxu0 0
    %109 = vmatpush1.bf16.msra.mxu0 0
    %110 = vmatprep.subr.bf16.mxu0 0
    %111 = vmatpush1.bf16.msra.mxu0 0
    %112 = vmatprep.mubr.bf16.mxu0 0
    %113 = vmatmul.mubr.bf16.gmra.mrb[0].mxu0 %v78
    %v114 = vpop.f32.mrb[0].mxu0
    %v115 = vadd.f32 0.0, %v114
    %v116 = vpop.f32.mrb[0].mxu0
    %v117 = vpop.f32.mrb[0].mxu0
    %v118 = vadd.f32 0.0, %v117
    %v119 = vpop.f32.mrb[0].mxu0
    %120 = vdwg.mxu0
    %123 = vrot.lane.b32.xlu0 %v115, 120
    %v124 = vpop.permute.xlu0 %123
    %125 = vrot.lane.b32.xlu0 %v118, 120
    %v126 = vpop.permute.xlu0 %125
    %129 = vrot.lane.b32.xlu0 %v115, 112
    %v130 = vpop.permute.xlu0 %129
    %131 = vrot.lane.b32.xlu0 %v118, 112
    %v132 = vpop.permute.xlu0 %131
    %135 = vrot.lane.b32.xlu0 %v115, 104
    %v136 = vpop.permute.xlu0 %135
    %137 = vrot.lane.b32.xlu0 %v118, 104
    %v138 = vpop.permute.xlu0 %137
    %v141 = vpack.c.bf16 %v115, %v115
    %v142 = vpack.c.bf16 %v118, %v118
    %v143 = vpack.c.bf16 %v124, %v124
    %v144 = vpack.c.bf16 %v126, %v126
    %v145 = vpack.c.bf16 %v130, %v130
    %v146 = vpack.c.bf16 %v132, %v132
    %v147 = vpack.c.bf16 %v136, %v136
    %v148 = vpack.c.bf16 %v138, %v138
    %150 = vrot.lane.b32.xlu0 %v141, 96
    %v151 = vpop.permute.xlu0 %150
    %vm152 = vcmask 64512
    %v154 = vsel %vm152, %v141, 0
    %v157 = vsel %vm152, %v151, 0
    %159 = vmatprep.subr.bf16.mxu0 0
    %160 = vmatpush1.bf16.xpose.msra.mxu0 %v157
    %161 = vmatprep.subr.bf16.mxu0 0
    %162 = vmatpush1.bf16.xpose.msra.mxu0 0
    %163 = vmatprep.subr.bf16.mxu0 0
    %164 = vmatpush1.bf16.xpose.msra.mxu0 0
    %165 = vmatprep.subr.bf16.mxu0 0
    %166 = vmatpush1.bf16.xpose.msra.mxu0 0
    %167 = vmatprep.subr.bf16.mxu0 0
    %168 = vmatpush1.bf16.xpose.msra.mxu0 0
    %169 = vmatprep.subr.bf16.mxu0 0
    %170 = vmatpush1.bf16.xpose.msra.mxu0 0
    %171 = vmatprep.subr.bf16.mxu0 0
    %172 = vmatpush1.bf16.xpose.msra.mxu0 0
    %173 = vmatprep.subr.bf16.mxu0 0
    %174 = vmatpush1.bf16.xpose.msra.mxu0 0
    %175 = vmatprep.subr.bf16.mxu0 0
    %176 = vmatpush1.bf16.xpose.msra.mxu0 0
    %177 = vmatprep.subr.bf16.mxu0 0
    %178 = vmatpush1.bf16.xpose.msra.mxu0 0
    %179 = vmatprep.subr.bf16.mxu0 0
    %180 = vmatpush1.bf16.xpose.msra.mxu0 0
    %181 = vmatprep.subr.bf16.mxu0 0
    %182 = vmatpush1.bf16.xpose.msra.mxu0 0
    %183 = vmatprep.subr.bf16.mxu0 0
    %184 = vmatpush1.bf16.xpose.msra.mxu0 0
    %185 = vmatprep.subr.bf16.mxu0 0
    %186 = vmatpush1.bf16.xpose.msra.mxu0 0
    %187 = vmatprep.subr.bf16.mxu0 0
    %188 = vmatpush1.bf16.xpose.msra.mxu0 0
    %189 = vmatprep.subr.bf16.mxu0 0
    %190 = vmatpush1.bf16.xpose.msra.mxu0 0
    %191 = vmatprep.mubr.bf16.mxu0 0
    %192 = vmatmul.mubr.bf16.gmra.mrb[0].mxu0 %v154
    %v193 = vpop.f32.mrb[0].mxu0
    %v194 = vadd.f32 0.0, %v193
    %v195 = vpop.f32.mrb[0].mxu0
    %v196 = vpop.f32.mrb[0].mxu0
    %v197 = vpop.f32.mrb[0].mxu0
    %198 = vdwg.mxu0
    %200 = vrot.lane.b32.xlu0 %v142, 96
    %v201 = vpop.permute.xlu0 %200
    %v203 = vsel %vm152, %v142, 0
    %v206 = vsel %vm152, %v201, 0
    %208 = vmatprep.subr.bf16.mxu0 0
    %209 = vmatpush1.bf16.xpose.msra.mxu0 %v206
    %210 = vmatprep.subr.bf16.mxu0 0
    %211 = vmatpush1.bf16.xpose.msra.mxu0 0
    %212 = vmatprep.subr.bf16.mxu0 0
    %213 = vmatpush1.bf16.xpose.msra.mxu0 0
    %214 = vmatprep.subr.bf16.mxu0 0
    %215 = vmatpush1.bf16.xpose.msra.mxu0 0
    %216 = vmatprep.subr.bf16.mxu0 0
    %217 = vmatpush1.bf16.xpose.msra.mxu0 0
    %218 = vmatprep.subr.bf16.mxu0 0
    %219 = vmatpush1.bf16.xpose.msra.mxu0 0
    %220 = vmatprep.subr.bf16.mxu0 0
    %221 = vmatpush1.bf16.xpose.msra.mxu0 0
    %222 = vmatprep.subr.bf16.mxu0 0
    %223 = vmatpush1.bf16.xpose.msra.mxu0 0
    %224 = vmatprep.subr.bf16.mxu0 0
    %225 = vmatpush1.bf16.xpose.msra.mxu0 0
    %226 = vmatprep.subr.bf16.mxu0 0
    %227 = vmatpush1.bf16.xpose.msra.mxu0 0
    %228 = vmatprep.subr.bf16.mxu0 0
    %229 = vmatpush1.bf16.xpose.msra.mxu0 0
    %230 = vmatprep.subr.bf16.mxu0 0
    %231 = vmatpush1.bf16.xpose.msra.mxu0 0
    %232 = vmatprep.subr.bf16.mxu0 0
    %233 = vmatpush1.bf16.xpose.msra.mxu0 0
    %234 = vmatprep.subr.bf16.mxu0 0
    %235 = vmatpush1.bf16.xpose.msra.mxu0 0
    %236 = vmatprep.subr.bf16.mxu0 0
    %237 = vmatpush1.bf16.xpose.msra.mxu0 0
    %238 = vmatprep.subr.bf16.mxu0 0
    %239 = vmatpush1.bf16.xpose.msra.mxu0 0
    %240 = vmatprep.mubr.bf16.mxu0 0
    %241 = vmatmul.mubr.bf16.gmra.mrb[0].mxu0 %v203
    %v242 = vpop.f32.mrb[0].mxu0
    %v243 = vadd.f32 0.0, %v242
    %v244 = vpop.f32.mrb[0].mxu0
    %v245 = vpop.f32.mrb[0].mxu0
    %v246 = vpop.f32.mrb[0].mxu0
    %247 = vdwg.mxu0
    %249 = vrot.lane.b32.xlu0 %v143, 96
    %v250 = vpop.permute.xlu0 %249
    %v252 = vsel %vm152, %v143, 0
    %v255 = vsel %vm152, %v250, 0
    %257 = vmatprep.subr.bf16.mxu0 0
    %258 = vmatpush1.bf16.xpose.msra.mxu0 %v255
    %259 = vmatprep.subr.bf16.mxu0 0
    %260 = vmatpush1.bf16.xpose.msra.mxu0 0
    %261 = vmatprep.subr.bf16.mxu0 0
    %262 = vmatpush1.bf16.xpose.msra.mxu0 0
    %263 = vmatprep.subr.bf16.mxu0 0
    %264 = vmatpush1.bf16.xpose.msra.mxu0 0
    %265 = vmatprep.subr.bf16.mxu0 0
    %266 = vmatpush1.bf16.xpose.msra.mxu0 0
    %267 = vmatprep.subr.bf16.mxu0 0
    %268 = vmatpush1.bf16.xpose.msra.mxu0 0
    %269 = vmatprep.subr.bf16.mxu0 0
    %270 = vmatpush1.bf16.xpose.msra.mxu0 0
    %271 = vmatprep.subr.bf16.mxu0 0
    %272 = vmatpush1.bf16.xpose.msra.mxu0 0
    %273 = vmatprep.subr.bf16.mxu0 0
    %274 = vmatpush1.bf16.xpose.msra.mxu0 0
    %275 = vmatprep.subr.bf16.mxu0 0
    %276 = vmatpush1.bf16.xpose.msra.mxu0 0
    %277 = vmatprep.subr.bf16.mxu0 0
    %278 = vmatpush1.bf16.xpose.msra.mxu0 0
    %279 = vmatprep.subr.bf16.mxu0 0
    %280 = vmatpush1.bf16.xpose.msra.mxu0 0
    %281 = vmatprep.subr.bf16.mxu0 0
    %282 = vmatpush1.bf16.xpose.msra.mxu0 0
    %283 = vmatprep.subr.bf16.mxu0 0
    %284 = vmatpush1.bf16.xpose.msra.mxu0 0
    %285 = vmatprep.subr.bf16.mxu0 0
    %286 = vmatpush1.bf16.xpose.msra.mxu0 0
    %287 = vmatprep.subr.bf16.mxu0 0
    %288 = vmatpush1.bf16.xpose.msra.mxu0 0
    %289 = vmatprep.mubr.bf16.mxu0 0
    %290 = vmatmul.mubr.bf16.gmra.mrb[0].mxu0 %v252
    %v291 = vpop.f32.mrb[0].mxu0
    %v292 = vadd.f32 0.0, %v291
    %v293 = vpop.f32.mrb[0].mxu0
    %v294 = vpop.f32.mrb[0].mxu0
    %v295 = vpop.f32.mrb[0].mxu0
    %296 = vdwg.mxu0
    %298 = vrot.lane.b32.xlu0 %v144, 96
    %v299 = vpop.permute.xlu0 %298
    %v301 = vsel %vm152, %v144, 0
    %v304 = vsel %vm152, %v299, 0
    %306 = vmatprep.subr.bf16.mxu0 0
    %307 = vmatpush1.bf16.xpose.msra.mxu0 %v304
    %308 = vmatprep.subr.bf16.mxu0 0
    %309 = vmatpush1.bf16.xpose.msra.mxu0 0
    %310 = vmatprep.subr.bf16.mxu0 0
    %311 = vmatpush1.bf16.xpose.msra.mxu0 0
    %312 = vmatprep.subr.bf16.mxu0 0
    %313 = vmatpush1.bf16.xpose.msra.mxu0 0
    %314 = vmatprep.subr.bf16.mxu0 0
    %315 = vmatpush1.bf16.xpose.msra.mxu0 0
    %316 = vmatprep.subr.bf16.mxu0 0
    %317 = vmatpush1.bf16.xpose.msra.mxu0 0
    %318 = vmatprep.subr.bf16.mxu0 0
    %319 = vmatpush1.bf16.xpose.msra.mxu0 0
    %320 = vmatprep.subr.bf16.mxu0 0
    %321 = vmatpush1.bf16.xpose.msra.mxu0 0
    %322 = vmatprep.subr.bf16.mxu0 0
    %323 = vmatpush1.bf16.xpose.msra.mxu0 0
    %324 = vmatprep.subr.bf16.mxu0 0
    %325 = vmatpush1.bf16.xpose.msra.mxu0 0
    %326 = vmatprep.subr.bf16.mxu0 0
    %327 = vmatpush1.bf16.xpose.msra.mxu0 0
    %328 = vmatprep.subr.bf16.mxu0 0
    %329 = vmatpush1.bf16.xpose.msra.mxu0 0
    %330 = vmatprep.subr.bf16.mxu0 0
    %331 = vmatpush1.bf16.xpose.msra.mxu0 0
    %332 = vmatprep.subr.bf16.mxu0 0
    %333 = vmatpush1.bf16.xpose.msra.mxu0 0
    %334 = vmatprep.subr.bf16.mxu0 0
    %335 = vmatpush1.bf16.xpose.msra.mxu0 0
    %336 = vmatprep.subr.bf16.mxu0 0
    %337 = vmatpush1.bf16.xpose.msra.mxu0 0
    %338 = vmatprep.mubr.bf16.mxu0 0
    %339 = vmatmul.mubr.bf16.gmra.mrb[0].mxu0 %v301
    %v340 = vpop.f32.mrb[0].mxu0
    %v341 = vadd.f32 0.0, %v340
    %v342 = vpop.f32.mrb[0].mxu0
    %v343 = vpop.f32.mrb[0].mxu0
    %v344 = vpop.f32.mrb[0].mxu0
    %345 = vdwg.mxu0
    %347 = vrot.lane.b32.xlu0 %v145, 96
    %v348 = vpop.permute.xlu0 %347
    %v350 = vsel %vm152, %v145, 0
    %v353 = vsel %vm152, %v348, 0
    %355 = vmatprep.subr.bf16.mxu0 0
    %356 = vmatpush1.bf16.xpose.msra.mxu0 %v353
    %357 = vmatprep.subr.bf16.mxu0 0
    %358 = vmatpush1.bf16.xpose.msra.mxu0 0
    %359 = vmatprep.subr.bf16.mxu0 0
    %360 = vmatpush1.bf16.xpose.msra.mxu0 0
    %361 = vmatprep.subr.bf16.mxu0 0
    %362 = vmatpush1.bf16.xpose.msra.mxu0 0
    %363 = vmatprep.subr.bf16.mxu0 0
    %364 = vmatpush1.bf16.xpose.msra.mxu0 0
    %365 = vmatprep.subr.bf16.mxu0 0
    %366 = vmatpush1.bf16.xpose.msra.mxu0 0
    %367 = vmatprep.subr.bf16.mxu0 0
    %368 = vmatpush1.bf16.xpose.msra.mxu0 0
    %369 = vmatprep.subr.bf16.mxu0 0
    %370 = vmatpush1.bf16.xpose.msra.mxu0 0
    %371 = vmatprep.subr.bf16.mxu0 0
    %372 = vmatpush1.bf16.xpose.msra.mxu0 0
    %373 = vmatprep.subr.bf16.mxu0 0
    %374 = vmatpush1.bf16.xpose.msra.mxu0 0
    %375 = vmatprep.subr.bf16.mxu0 0
    %376 = vmatpush1.bf16.xpose.msra.mxu0 0
    %377 = vmatprep.subr.bf16.mxu0 0
    %378 = vmatpush1.bf16.xpose.msra.mxu0 0
    %379 = vmatprep.subr.bf16.mxu0 0
    %380 = vmatpush1.bf16.xpose.msra.mxu0 0
    %381 = vmatprep.subr.bf16.mxu0 0
    %382 = vmatpush1.bf16.xpose.msra.mxu0 0
    %383 = vmatprep.subr.bf16.mxu0 0
    %384 = vmatpush1.bf16.xpose.msra.mxu0 0
    %385 = vmatprep.subr.bf16.mxu0 0
    %386 = vmatpush1.bf16.xpose.msra.mxu0 0
    %387 = vmatprep.mubr.bf16.mxu0 0
    %388 = vmatmul.mubr.bf16.gmra.mrb[0].mxu0 %v350
    %v389 = vpop.f32.mrb[0].mxu0
    %v390 = vadd.f32 0.0, %v389
    %v391 = vpop.f32.mrb[0].mxu0
    %v392 = vpop.f32.mrb[0].mxu0
    %v393 = vpop.f32.mrb[0].mxu0
    %394 = vdwg.mxu0
    %396 = vrot.lane.b32.xlu0 %v146, 96
    %v397 = vpop.permute.xlu0 %396
    %v399 = vsel %vm152, %v146, 0
    %v402 = vsel %vm152, %v397, 0
    %404 = vmatprep.subr.bf16.mxu0 0
    %405 = vmatpush1.bf16.xpose.msra.mxu0 %v402
    %406 = vmatprep.subr.bf16.mxu0 0
    %407 = vmatpush1.bf16.xpose.msra.mxu0 0
    %408 = vmatprep.subr.bf16.mxu0 0
    %409 = vmatpush1.bf16.xpose.msra.mxu0 0
    %410 = vmatprep.subr.bf16.mxu0 0
    %411 = vmatpush1.bf16.xpose.msra.mxu0 0
    %412 = vmatprep.subr.bf16.mxu0 0
    %413 = vmatpush1.bf16.xpose.msra.mxu0 0
    %414 = vmatprep.subr.bf16.mxu0 0
    %415 = vmatpush1.bf16.xpose.msra.mxu0 0
    %416 = vmatprep.subr.bf16.mxu0 0
    %417 = vmatpush1.bf16.xpose.msra.mxu0 0
    %418 = vmatprep.subr.bf16.mxu0 0
    %419 = vmatpush1.bf16.xpose.msra.mxu0 0
    %420 = vmatprep.subr.bf16.mxu0 0
    %421 = vmatpush1.bf16.xpose.msra.mxu0 0
    %422 = vmatprep.subr.bf16.mxu0 0
    %423 = vmatpush1.bf16.xpose.msra.mxu0 0
    %424 = vmatprep.subr.bf16.mxu0 0
    %425 = vmatpush1.bf16.xpose.msra.mxu0 0
    %426 = vmatprep.subr.bf16.mxu0 0
    %427 = vmatpush1.bf16.xpose.msra.mxu0 0
    %428 = vmatprep.subr.bf16.mxu0 0
    %429 = vmatpush1.bf16.xpose.msra.mxu0 0
    %430 = vmatprep.subr.bf16.mxu0 0
    %431 = vmatpush1.bf16.xpose.msra.mxu0 0
    %432 = vmatprep.subr.bf16.mxu0 0
    %433 = vmatpush1.bf16.xpose.msra.mxu0 0
    %434 = vmatprep.subr.bf16.mxu0 0
    %435 = vmatpush1.bf16.xpose.msra.mxu0 0
    %436 = vmatprep.mubr.bf16.mxu0 0
    %437 = vmatmul.mubr.bf16.gmra.mrb[0].mxu0 %v399
    %v438 = vpop.f32.mrb[0].mxu0
    %v439 = vadd.f32 0.0, %v438
    %v440 = vpop.f32.mrb[0].mxu0
    %v441 = vpop.f32.mrb[0].mxu0
    %v442 = vpop.f32.mrb[0].mxu0
    %443 = vdwg.mxu0
    %445 = vrot.lane.b32.xlu0 %v147, 96
    %v446 = vpop.permute.xlu0 %445
    %v448 = vsel %vm152, %v147, 0
    %v451 = vsel %vm152, %v446, 0
    %453 = vmatprep.subr.bf16.mxu0 0
    %454 = vmatpush1.bf16.xpose.msra.mxu0 %v451
    %455 = vmatprep.subr.bf16.mxu0 0
    %456 = vmatpush1.bf16.xpose.msra.mxu0 0
    %457 = vmatprep.subr.bf16.mxu0 0
    %458 = vmatpush1.bf16.xpose.msra.mxu0 0
    %459 = vmatprep.subr.bf16.mxu0 0
    %460 = vmatpush1.bf16.xpose.msra.mxu0 0
    %461 = vmatprep.subr.bf16.mxu0 0
    %462 = vmatpush1.bf16.xpose.msra.mxu0 0
    %463 = vmatprep.subr.bf16.mxu0 0
    %464 = vmatpush1.bf16.xpose.msra.mxu0 0
    %465 = vmatprep.subr.bf16.mxu0 0
    %466 = vmatpush1.bf16.xpose.msra.mxu0 0
    %467 = vmatprep.subr.bf16.mxu0 0
    %468 = vmatpush1.bf16.xpose.msra.mxu0 0
    %469 = vmatprep.subr.bf16.mxu0 0
    %470 = vmatpush1.bf16.xpose.msra.mxu0 0
    %471 = vmatprep.subr.bf16.mxu0 0
    %472 = vmatpush1.bf16.xpose.msra.mxu0 0
    %473 = vmatprep.subr.bf16.mxu0 0
    %474 = vmatpush1.bf16.xpose.msra.mxu0 0
    %475 = vmatprep.subr.bf16.mxu0 0
    %476 = vmatpush1.bf16.xpose.msra.mxu0 0
    %477 = vmatprep.subr.bf16.mxu0 0
    %478 = vmatpush1.bf16.xpose.msra.mxu0 0
    %479 = vmatprep.subr.bf16.mxu0 0
    %480 = vmatpush1.bf16.xpose.msra.mxu0 0
    %481 = vmatprep.subr.bf16.mxu0 0
    %482 = vmatpush1.bf16.xpose.msra.mxu0 0
    %483 = vmatprep.subr.bf16.mxu0 0
    %484 = vmatpush1.bf16.xpose.msra.mxu0 0
    %485 = vmatprep.mubr.bf16.mxu0 0
    %486 = vmatmul.mubr.bf16.gmra.mrb[0].mxu0 %v448
    %v487 = vpop.f32.mrb[0].mxu0
    %v488 = vadd.f32 0.0, %v487
    %v489 = vpop.f32.mrb[0].mxu0
    %v490 = vpop.f32.mrb[0].mxu0
    %v491 = vpop.f32.mrb[0].mxu0
    %492 = vdwg.mxu0
    %494 = vrot.lane.b32.xlu0 %v148, 96
    %v495 = vpop.permute.xlu0 %494
    %v497 = vsel %vm152, %v148, 0
    %v500 = vsel %vm152, %v495, 0
    %502 = vmatprep.subr.bf16.mxu0 0
    %503 = vmatpush1.bf16.xpose.msra.mxu0 %v500
    %504 = vmatprep.subr.bf16.mxu0 0
    %505 = vmatpush1.bf16.xpose.msra.mxu0 0
    %506 = vmatprep.subr.bf16.mxu0 0
    %507 = vmatpush1.bf16.xpose.msra.mxu0 0
    %508 = vmatprep.subr.bf16.mxu0 0
    %509 = vmatpush1.bf16.xpose.msra.mxu0 0
    %510 = vmatprep.subr.bf16.mxu0 0
    %511 = vmatpush1.bf16.xpose.msra.mxu0 0
    %512 = vmatprep.subr.bf16.mxu0 0
    %513 = vmatpush1.bf16.xpose.msra.mxu0 0
    %514 = vmatprep.subr.bf16.mxu0 0
    %515 = vmatpush1.bf16.xpose.msra.mxu0 0
    %516 = vmatprep.subr.bf16.mxu0 0
    %517 = vmatpush1.bf16.xpose.msra.mxu0 0
    %518 = vmatprep.subr.bf16.mxu0 0
    %519 = vmatpush1.bf16.xpose.msra.mxu0 0
    %520 = vmatprep.subr.bf16.mxu0 0
    %521 = vmatpush1.bf16.xpose.msra.mxu0 0
    %522 = vmatprep.subr.bf16.mxu0 0
    %523 = vmatpush1.bf16.xpose.msra.mxu0 0
    %524 = vmatprep.subr.bf16.mxu0 0
    %525 = vmatpush1.bf16.xpose.msra.mxu0 0
    %526 = vmatprep.subr.bf16.mxu0 0
    %527 = vmatpush1.bf16.xpose.msra.mxu0 0
    %528 = vmatprep.subr.bf16.mxu0 0
    %529 = vmatpush1.bf16.xpose.msra.mxu0 0
    %530 = vmatprep.subr.bf16.mxu0 0
    %531 = vmatpush1.bf16.xpose.msra.mxu0 0
    %532 = vmatprep.subr.bf16.mxu0 0
    %533 = vmatpush1.bf16.xpose.msra.mxu0 0
    %534 = vmatprep.mubr.bf16.mxu0 0
    %535 = vmatmul.mubr.bf16.gmra.mrb[0].mxu0 %v497
    %v536 = vpop.f32.mrb[0].mxu0
    %v537 = vadd.f32 0.0, %v536
    %v538 = vpop.f32.mrb[0].mxu0
    %v539 = vpop.f32.mrb[0].mxu0
    %v540 = vpop.f32.mrb[0].mxu0
    %541 = vdwg.mxu0
    %v542 = vsel %vm152, %v194, -inf
    %543 = vmax.xlane.f32.xlu0 %v542
    %v544 = vpop.xlane.xlu0 %543
    %v545 = vsel %vm152, %v243, -inf
    %546 = vmax.xlane.f32.xlu0 %v545
    %v547 = vpop.xlane.xlu0 %546
    %v548 = vsel %vm152, %v292, -inf
    %549 = vmax.xlane.f32.xlu0 %v548
    %v550 = vpop.xlane.xlu0 %549
    %v551 = vsel %vm152, %v341, -inf
    %552 = vmax.xlane.f32.xlu0 %v551
    %v553 = vpop.xlane.xlu0 %552
    %v554 = vsel %vm152, %v390, -inf
    %555 = vmax.xlane.f32.xlu0 %v554
    %v556 = vpop.xlane.xlu0 %555
    %v557 = vsel %vm152, %v439, -inf
    %558 = vmax.xlane.f32.xlu0 %v557
    %v559 = vpop.xlane.xlu0 %558
    %v560 = vsel %vm152, %v488, -inf
    %561 = vmax.xlane.f32.xlu0 %v560
    %v562 = vpop.xlane.xlu0 %561
    %v563 = vsel %vm152, %v537, -inf
    %564 = vmax.xlane.f32.xlu0 %v563
    %v565 = vpop.xlane.xlu0 %564
    %v566 = vsub.f32 %v194, %v544
    %v567 = vsub.f32 %v243, %v547
    %v568 = vsub.f32 %v292, %v550
    %v569 = vsub.f32 %v341, %v553
    %v570 = vsub.f32 %v390, %v556
    %v571 = vsub.f32 %v439, %v559
    %v572 = vsub.f32 %v488, %v562
    %v573 = vsub.f32 %v537, %v565
    %v574 = vmul.f32 %v566, 1.442695
    %v575 = vpow.pop %v574
    %v576 = vmul.f32 %v567, 1.442695
    %v577 = vpow.pop %v576
    %v578 = vmul.f32 %v568, 1.442695
    %v579 = vpow.pop %v578
    %v580 = vmul.f32 %v569, 1.442695
    %v581 = vpow.pop %v580
    %v582 = vmul.f32 %v570, 1.442695
    %v583 = vpow.pop %v582
    %v584 = vmul.f32 %v571, 1.442695
    %v585 = vpow.pop %v584
    %v586 = vmul.f32 %v572, 1.442695
    %v587 = vpow.pop %v586
    %v588 = vmul.f32 %v573, 1.442695
    %v589 = vpow.pop %v588
    %v590 = vsel %vm152, %v575, 0.0
    %591 = vadd.xlane.f32.xlu0 %v590
    %v592 = vpop.xlane.xlu0 %591
    %v593 = vsel %vm152, %v577, 0.0
    %594 = vadd.xlane.f32.xlu0 %v593
    %v595 = vpop.xlane.xlu0 %594
    %v596 = vsel %vm152, %v579, 0.0
    %597 = vadd.xlane.f32.xlu0 %v596
    %v598 = vpop.xlane.xlu0 %597
    %v599 = vsel %vm152, %v581, 0.0
    %600 = vadd.xlane.f32.xlu0 %v599
    %v601 = vpop.xlane.xlu0 %600
    %v602 = vsel %vm152, %v583, 0.0
    %603 = vadd.xlane.f32.xlu0 %v602
    %v604 = vpop.xlane.xlu0 %603
    %v605 = vsel %vm152, %v585, 0.0
    %606 = vadd.xlane.f32.xlu0 %v605
    %v607 = vpop.xlane.xlu0 %606
    %v608 = vsel %vm152, %v587, 0.0
    %609 = vadd.xlane.f32.xlu0 %v608
    %v610 = vpop.xlane.xlu0 %609
    %v611 = vsel %vm152, %v589, 0.0
    %612 = vadd.xlane.f32.xlu0 %v611
    %v613 = vpop.xlane.xlu0 %612
    %v614 = vrcp.pop %v592
    %v615 = vrcp.pop %v595
    %v616 = vrcp.pop %v598
    %v617 = vrcp.pop %v601
    %v618 = vrcp.pop %v604
    %v619 = vrcp.pop %v607
    %v620 = vrcp.pop %v610
    %v621 = vrcp.pop %v613
    %v622 = vmul.f32 %v575, %v614
    %v623 = vmul.f32 %v577, %v615
    %v624 = vmul.f32 %v579, %v616
    %v625 = vmul.f32 %v581, %v617
    %v626 = vmul.f32 %v583, %v618
    %v627 = vmul.f32 %v585, %v619
    %v628 = vmul.f32 %v587, %v620
    %v629 = vmul.f32 %v589, %v621
    %v630 = vpack.c.bf16 %v622, %v622
    %v631 = vpack.c.bf16 %v623, %v623
    %v632 = vpack.c.bf16 %v624, %v624
    %v633 = vpack.c.bf16 %v625, %v625
    %v634 = vpack.c.bf16 %v626, %v626
    %v635 = vpack.c.bf16 %v627, %v627
    %v636 = vpack.c.bf16 %v628, %v628
    %v637 = vpack.c.bf16 %v629, %v629
    %638 = vrot.lane.b32.xlu0 %v141, 64
    %v639 = vpop.permute.xlu0 %638
    %v641 = vsel %vm152, %v630, 0
    %vm643 = vcmask 1043456
    %v645 = vsel %vm643, %v639, 0
    %647 = vmatprep.subr.bf16.mxu0 0
    %648 = vmatpush1.bf16.msra.mxu0 %v645
    %649 = vmatprep.subr.bf16.mxu0 0
    %650 = vmatpush1.bf16.msra.mxu0 0
    %651 = vmatprep.subr.bf16.mxu0 0
    %652 = vmatpush1.bf16.msra.mxu0 0
    %653 = vmatprep.subr.bf16.mxu0 0
    %654 = vmatpush1.bf16.msra.mxu0 0
    %655 = vmatprep.subr.bf16.mxu0 0
    %656 = vmatpush1.bf16.msra.mxu0 0
    %657 = vmatprep.subr.bf16.mxu0 0
    %658 = vmatpush1.bf16.msra.mxu0 0
    %659 = vmatprep.subr.bf16.mxu0 0
    %660 = vmatpush1.bf16.msra.mxu0 0
    %661 = vmatprep.subr.bf16.mxu0 0
    %662 = vmatpush1.bf16.msra.mxu0 0
    %663 = vmatprep.subr.bf16.mxu0 0
    %664 = vmatpush1.bf16.msra.mxu0 0
    %665 = vmatprep.subr.bf16.mxu0 0
    %666 = vmatpush1.bf16.msra.mxu0 0
    %667 = vmatprep.subr.bf16.mxu0 0
    %668 = vmatpush1.bf16.msra.mxu0 0
    %669 = vmatprep.subr.bf16.mxu0 0
    %670 = vmatpush1.bf16.msra.mxu0 0
    %671 = vmatprep.subr.bf16.mxu0 0
    %672 = vmatpush1.bf16.msra.mxu0 0
    %673 = vmatprep.subr.bf16.mxu0 0
    %674 = vmatpush1.bf16.msra.mxu0 0
    %675 = vmatprep.subr.bf16.mxu0 0
    %676 = vmatpush1.bf16.msra.mxu0 0
    %677 = vmatprep.subr.bf16.mxu0 0
    %678 = vmatpush1.bf16.msra.mxu0 0
    %679 = vmatprep.mubr.bf16.mxu0 0
    %680 = vmatmul.mubr.bf16.gmra.mrb[0].mxu0 %v641
    %v681 = vpop.f32.mrb[0].mxu0
    %v682 = vadd.f32 0.0, %v681
    %v683 = vpop.f32.mrb[0].mxu0
    %v684 = vpop.f32.mrb[0].mxu0
    %v685 = vpop.f32.mrb[0].mxu0
    %686 = vdwg.mxu0
    %687 = vrot.lane.b32.xlu0 %v142, 64
    %v688 = vpop.permute.xlu0 %687
    %v690 = vsel %vm152, %v631, 0
    %v693 = vsel %vm643, %v688, 0
    %695 = vmatprep.subr.bf16.mxu0 0
    %696 = vmatpush1.bf16.msra.mxu0 %v693
    %697 = vmatprep.subr.bf16.mxu0 0
    %698 = vmatpush1.bf16.msra.mxu0 0
    %699 = vmatprep.subr.bf16.mxu0 0
    %700 = vmatpush1.bf16.msra.mxu0 0
    %701 = vmatprep.subr.bf16.mxu0 0
    %702 = vmatpush1.bf16.msra.mxu0 0
    %703 = vmatprep.subr.bf16.mxu0 0
    %704 = vmatpush1.bf16.msra.mxu0 0
    %705 = vmatprep.subr.bf16.mxu0 0
    %706 = vmatpush1.bf16.msra.mxu0 0
    %707 = vmatprep.subr.bf16.mxu0 0
    %708 = vmatpush1.bf16.msra.mxu0 0
    %709 = vmatprep.subr.bf16.mxu0 0
    %710 = vmatpush1.bf16.msra.mxu0 0
    %711 = vmatprep.subr.bf16.mxu0 0
    %712 = vmatpush1.bf16.msra.mxu0 0
    %713 = vmatprep.subr.bf16.mxu0 0
    %714 = vmatpush1.bf16.msra.mxu0 0
    %715 = vmatprep.subr.bf16.mxu0 0
    %716 = vmatpush1.bf16.msra.mxu0 0
    %717 = vmatprep.subr.bf16.mxu0 0
    %718 = vmatpush1.bf16.msra.mxu0 0
    %719 = vmatprep.subr.bf16.mxu0 0
    %720 = vmatpush1.bf16.msra.mxu0 0
    %721 = vmatprep.subr.bf16.mxu0 0
    %722 = vmatpush1.bf16.msra.mxu0 0
    %723 = vmatprep.subr.bf16.mxu0 0
    %724 = vmatpush1.bf16.msra.mxu0 0
    %725 = vmatprep.subr.bf16.mxu0 0
    %726 = vmatpush1.bf16.msra.mxu0 0
    %727 = vmatprep.mubr.bf16.mxu0 0
    %728 = vmatmul.mubr.bf16.gmra.mrb[0].mxu0 %v690
    %v729 = vpop.f32.mrb[0].mxu0
    %v730 = vadd.f32 0.0, %v729
    %v731 = vpop.f32.mrb[0].mxu0
    %v732 = vpop.f32.mrb[0].mxu0
    %v733 = vpop.f32.mrb[0].mxu0
    %734 = vdwg.mxu0
    %735 = vrot.lane.b32.xlu0 %v143, 64
    %v736 = vpop.permute.xlu0 %735
    %v738 = vsel %vm152, %v632, 0
    %v741 = vsel %vm643, %v736, 0
    %743 = vmatprep.subr.bf16.mxu0 0
    %744 = vmatpush1.bf16.msra.mxu0 %v741
    %745 = vmatprep.subr.bf16.mxu0 0
    %746 = vmatpush1.bf16.msra.mxu0 0
    %747 = vmatprep.subr.bf16.mxu0 0
    %748 = vmatpush1.bf16.msra.mxu0 0
    %749 = vmatprep.subr.bf16.mxu0 0
    %750 = vmatpush1.bf16.msra.mxu0 0
    %751 = vmatprep.subr.bf16.mxu0 0
    %752 = vmatpush1.bf16.msra.mxu0 0
    %753 = vmatprep.subr.bf16.mxu0 0
    %754 = vmatpush1.bf16.msra.mxu0 0
    %755 = vmatprep.subr.bf16.mxu0 0
    %756 = vmatpush1.bf16.msra.mxu0 0
    %757 = vmatprep.subr.bf16.mxu0 0
    %758 = vmatpush1.bf16.msra.mxu0 0
    %759 = vmatprep.subr.bf16.mxu0 0
    %760 = vmatpush1.bf16.msra.mxu0 0
    %761 = vmatprep.subr.bf16.mxu0 0
    %762 = vmatpush1.bf16.msra.mxu0 0
    %763 = vmatprep.subr.bf16.mxu0 0
    %764 = vmatpush1.bf16.msra.mxu0 0
    %765 = vmatprep.subr.bf16.mxu0 0
    %766 = vmatpush1.bf16.msra.mxu0 0
    %767 = vmatprep.subr.bf16.mxu0 0
    %768 = vmatpush1.bf16.msra.mxu0 0
    %769 = vmatprep.subr.bf16.mxu0 0
    %770 = vmatpush1.bf16.msra.mxu0 0
    %771 = vmatprep.subr.bf16.mxu0 0
    %772 = vmatpush1.bf16.msra.mxu0 0
    %773 = vmatprep.subr.bf16.mxu0 0
    %774 = vmatpush1.bf16.msra.mxu0 0
    %775 = vmatprep.mubr.bf16.mxu0 0
    %776 = vmatmul.mubr.bf16.gmra.mrb[0].mxu0 %v738
    %v777 = vpop.f32.mrb[0].mxu0
    %v778 = vadd.f32 0.0, %v777
    %v779 = vpop.f32.mrb[0].mxu0
    %v780 = vpop.f32.mrb[0].mxu0
    %v781 = vpop.f32.mrb[0].mxu0
    %782 = vdwg.mxu0
    %783 = vrot.lane.b32.xlu0 %v144, 64
    %v784 = vpop.permute.xlu0 %783
    %v786 = vsel %vm152, %v633, 0
    %v789 = vsel %vm643, %v784, 0
    %791 = vmatprep.subr.bf16.mxu0 0
    %792 = vmatpush1.bf16.msra.mxu0 %v789
    %793 = vmatprep.subr.bf16.mxu0 0
    %794 = vmatpush1.bf16.msra.mxu0 0
    %795 = vmatprep.subr.bf16.mxu0 0
    %796 = vmatpush1.bf16.msra.mxu0 0
    %797 = vmatprep.subr.bf16.mxu0 0
    %798 = vmatpush1.bf16.msra.mxu0 0
    %799 = vmatprep.subr.bf16.mxu0 0
    %800 = vmatpush1.bf16.msra.mxu0 0
    %801 = vmatprep.subr.bf16.mxu0 0
    %802 = vmatpush1.bf16.msra.mxu0 0
    %803 = vmatprep.subr.bf16.mxu0 0
    %804 = vmatpush1.bf16.msra.mxu0 0
    %805 = vmatprep.subr.bf16.mxu0 0
    %806 = vmatpush1.bf16.msra.mxu0 0
    %807 = vmatprep.subr.bf16.mxu0 0
    %808 = vmatpush1.bf16.msra.mxu0 0
    %809 = vmatprep.subr.bf16.mxu0 0
    %810 = vmatpush1.bf16.msra.mxu0 0
    %811 = vmatprep.subr.bf16.mxu0 0
    %812 = vmatpush1.bf16.msra.mxu0 0
    %813 = vmatprep.subr.bf16.mxu0 0
    %814 = vmatpush1.bf16.msra.mxu0 0
    %815 = vmatprep.subr.bf16.mxu0 0
    %816 = vmatpush1.bf16.msra.mxu0 0
    %817 = vmatprep.subr.bf16.mxu0 0
    %818 = vmatpush1.bf16.msra.mxu0 0
    %819 = vmatprep.subr.bf16.mxu0 0
    %820 = vmatpush1.bf16.msra.mxu0 0
    %821 = vmatprep.subr.bf16.mxu0 0
    %822 = vmatpush1.bf16.msra.mxu0 0
    %823 = vmatprep.mubr.bf16.mxu0 0
    %824 = vmatmul.mubr.bf16.gmra.mrb[0].mxu0 %v786
    %v825 = vpop.f32.mrb[0].mxu0
    %v826 = vadd.f32 0.0, %v825
    %v827 = vpop.f32.mrb[0].mxu0
    %v828 = vpop.f32.mrb[0].mxu0
    %v829 = vpop.f32.mrb[0].mxu0
    %830 = vdwg.mxu0
    %831 = vrot.lane.b32.xlu0 %v145, 64
    %v832 = vpop.permute.xlu0 %831
    %v834 = vsel %vm152, %v634, 0
    %v837 = vsel %vm643, %v832, 0
    %839 = vmatprep.subr.bf16.mxu0 0
    %840 = vmatpush1.bf16.msra.mxu0 %v837
    %841 = vmatprep.subr.bf16.mxu0 0
    %842 = vmatpush1.bf16.msra.mxu0 0
    %843 = vmatprep.subr.bf16.mxu0 0
    %844 = vmatpush1.bf16.msra.mxu0 0
    %845 = vmatprep.subr.bf16.mxu0 0
    %846 = vmatpush1.bf16.msra.mxu0 0
    %847 = vmatprep.subr.bf16.mxu0 0
    %848 = vmatpush1.bf16.msra.mxu0 0
    %849 = vmatprep.subr.bf16.mxu0 0
    %850 = vmatpush1.bf16.msra.mxu0 0
    %851 = vmatprep.subr.bf16.mxu0 0
    %852 = vmatpush1.bf16.msra.mxu0 0
    %853 = vmatprep.subr.bf16.mxu0 0
    %854 = vmatpush1.bf16.msra.mxu0 0
    %855 = vmatprep.subr.bf16.mxu0 0
    %856 = vmatpush1.bf16.msra.mxu0 0
    %857 = vmatprep.subr.bf16.mxu0 0
    %858 = vmatpush1.bf16.msra.mxu0 0
    %859 = vmatprep.subr.bf16.mxu0 0
    %860 = vmatpush1.bf16.msra.mxu0 0
    %861 = vmatprep.subr.bf16.mxu0 0
    %862 = vmatpush1.bf16.msra.mxu0 0
    %863 = vmatprep.subr.bf16.mxu0 0
    %864 = vmatpush1.bf16.msra.mxu0 0
    %865 = vmatprep.subr.bf16.mxu0 0
    %866 = vmatpush1.bf16.msra.mxu0 0
    %867 = vmatprep.subr.bf16.mxu0 0
    %868 = vmatpush1.bf16.msra.mxu0 0
    %869 = vmatprep.subr.bf16.mxu0 0
    %870 = vmatpush1.bf16.msra.mxu0 0
    %871 = vmatprep.mubr.bf16.mxu0 0
    %872 = vmatmul.mubr.bf16.gmra.mrb[0].mxu0 %v834
    %v873 = vpop.f32.mrb[0].mxu0
    %v874 = vadd.f32 0.0, %v873
    %v875 = vpop.f32.mrb[0].mxu0
    %v876 = vpop.f32.mrb[0].mxu0
    %v877 = vpop.f32.mrb[0].mxu0
    %878 = vdwg.mxu0
    %879 = vrot.lane.b32.xlu0 %v146, 64
    %v880 = vpop.permute.xlu0 %879
    %v882 = vsel %vm152, %v635, 0
    %v885 = vsel %vm643, %v880, 0
    %887 = vmatprep.subr.bf16.mxu0 0
    %888 = vmatpush1.bf16.msra.mxu0 %v885
    %889 = vmatprep.subr.bf16.mxu0 0
    %890 = vmatpush1.bf16.msra.mxu0 0
    %891 = vmatprep.subr.bf16.mxu0 0
    %892 = vmatpush1.bf16.msra.mxu0 0
    %893 = vmatprep.subr.bf16.mxu0 0
    %894 = vmatpush1.bf16.msra.mxu0 0
    %895 = vmatprep.subr.bf16.mxu0 0
    %896 = vmatpush1.bf16.msra.mxu0 0
    %897 = vmatprep.subr.bf16.mxu0 0
    %898 = vmatpush1.bf16.msra.mxu0 0
    %899 = vmatprep.subr.bf16.mxu0 0
    %900 = vmatpush1.bf16.msra.mxu0 0
    %901 = vmatprep.subr.bf16.mxu0 0
    %902 = vmatpush1.bf16.msra.mxu0 0
    %903 = vmatprep.subr.bf16.mxu0 0
    %904 = vmatpush1.bf16.msra.mxu0 0
    %905 = vmatprep.subr.bf16.mxu0 0
    %906 = vmatpush1.bf16.msra.mxu0 0
    %907 = vmatprep.subr.bf16.mxu0 0
    %908 = vmatpush1.bf16.msra.mxu0 0
    %909 = vmatprep.subr.bf16.mxu0 0
    %910 = vmatpush1.bf16.msra.mxu0 0
    %911 = vmatprep.subr.bf16.mxu0 0
    %912 = vmatpush1.bf16.msra.mxu0 0
    %913 = vmatprep.subr.bf16.mxu0 0
    %914 = vmatpush1.bf16.msra.mxu0 0
    %915 = vmatprep.subr.bf16.mxu0 0
    %916 = vmatpush1.bf16.msra.mxu0 0
    %917 = vmatprep.subr.bf16.mxu0 0
    %918 = vmatpush1.bf16.msra.mxu0 0
    %919 = vmatprep.mubr.bf16.mxu0 0
    %920 = vmatmul.mubr.bf16.gmra.mrb[0].mxu0 %v882
    %v921 = vpop.f32.mrb[0].mxu0
    %v922 = vadd.f32 0.0, %v921
    %v923 = vpop.f32.mrb[0].mxu0
    %v924 = vpop.f32.mrb[0].mxu0
    %v925 = vpop.f32.mrb[0].mxu0
    %926 = vdwg.mxu0
    %927 = vrot.lane.b32.xlu0 %v147, 64
    %v928 = vpop.permute.xlu0 %927
    %v930 = vsel %vm152, %v636, 0
    %v933 = vsel %vm643, %v928, 0
    %935 = vmatprep.subr.bf16.mxu0 0
    %936 = vmatpush1.bf16.msra.mxu0 %v933
    %937 = vmatprep.subr.bf16.mxu0 0
    %938 = vmatpush1.bf16.msra.mxu0 0
    %939 = vmatprep.subr.bf16.mxu0 0
    %940 = vmatpush1.bf16.msra.mxu0 0
    %941 = vmatprep.subr.bf16.mxu0 0
    %942 = vmatpush1.bf16.msra.mxu0 0
    %943 = vmatprep.subr.bf16.mxu0 0
    %944 = vmatpush1.bf16.msra.mxu0 0
    %945 = vmatprep.subr.bf16.mxu0 0
    %946 = vmatpush1.bf16.msra.mxu0 0
    %947 = vmatprep.subr.bf16.mxu0 0
    %948 = vmatpush1.bf16.msra.mxu0 0
    %949 = vmatprep.subr.bf16.mxu0 0
    %950 = vmatpush1.bf16.msra.mxu0 0
    %951 = vmatprep.subr.bf16.mxu0 0
    %952 = vmatpush1.bf16.msra.mxu0 0
    %953 = vmatprep.subr.bf16.mxu0 0
    %954 = vmatpush1.bf16.msra.mxu0 0
    %955 = vmatprep.subr.bf16.mxu0 0
    %956 = vmatpush1.bf16.msra.mxu0 0
    %957 = vmatprep.subr.bf16.mxu0 0
    %958 = vmatpush1.bf16.msra.mxu0 0
    %959 = vmatprep.subr.bf16.mxu0 0
    %960 = vmatpush1.bf16.msra.mxu0 0
    %961 = vmatprep.subr.bf16.mxu0 0
    %962 = vmatpush1.bf16.msra.mxu0 0
    %963 = vmatprep.subr.bf16.mxu0 0
    %964 = vmatpush1.bf16.msra.mxu0 0
    %965 = vmatprep.subr.bf16.mxu0 0
    %966 = vmatpush1.bf16.msra.mxu0 0
    %967 = vmatprep.mubr.bf16.mxu0 0
    %968 = vmatmul.mubr.bf16.gmra.mrb[0].mxu0 %v930
    %v969 = vpop.f32.mrb[0].mxu0
    %v970 = vadd.f32 0.0, %v969
    %v971 = vpop.f32.mrb[0].mxu0
    %v972 = vpop.f32.mrb[0].mxu0
    %v973 = vpop.f32.mrb[0].mxu0
    %974 = vdwg.mxu0
    %975 = vrot.lane.b32.xlu0 %v148, 64
    %v976 = vpop.permute.xlu0 %975
    %v978 = vsel %vm152, %v637, 0
    %v981 = vsel %vm643, %v976, 0
    %983 = vmatprep.subr.bf16.mxu0 0
    %984 = vmatpush1.bf16.msra.mxu0 %v981
    %985 = vmatprep.subr.bf16.mxu0 0
    %986 = vmatpush1.bf16.msra.mxu0 0
    %987 = vmatprep.subr.bf16.mxu0 0
    %988 = vmatpush1.bf16.msra.mxu0 0
    %989 = vmatprep.subr.bf16.mxu0 0
    %990 = vmatpush1.bf16.msra.mxu0 0
    %991 = vmatprep.subr.bf16.mxu0 0
    %992 = vmatpush1.bf16.msra.mxu0 0
    %993 = vmatprep.subr.bf16.mxu0 0
    %994 = vmatpush1.bf16.msra.mxu0 0
    %995 = vmatprep.subr.bf16.mxu0 0
    %996 = vmatpush1.bf16.msra.mxu0 0
    %997 = vmatprep.subr.bf16.mxu0 0
    %998 = vmatpush1.bf16.msra.mxu0 0
    %999 = vmatprep.subr.bf16.mxu0 0
    %1000 = vmatpush1.bf16.msra.mxu0 0
    %1001 = vmatprep.subr.bf16.mxu0 0
    %1002 = vmatpush1.bf16.msra.mxu0 0
    %1003 = vmatprep.subr.bf16.mxu0 0
    %1004 = vmatpush1.bf16.msra.mxu0 0
    %1005 = vmatprep.subr.bf16.mxu0 0
    %1006 = vmatpush1.bf16.msra.mxu0 0
    %1007 = vmatprep.subr.bf16.mxu0 0
    %1008 = vmatpush1.bf16.msra.mxu0 0
    %1009 = vmatprep.subr.bf16.mxu0 0
    %1010 = vmatpush1.bf16.msra.mxu0 0
    %1011 = vmatprep.subr.bf16.mxu0 0
    %1012 = vmatpush1.bf16.msra.mxu0 0
    %1013 = vmatprep.subr.bf16.mxu0 0
    %1014 = vmatpush1.bf16.msra.mxu0 0
    %1015 = vmatprep.mubr.bf16.mxu0 0
    %1016 = vmatmul.mubr.bf16.gmra.mrb[0].mxu0 %v978
    %v1017 = vpop.f32.mrb[0].mxu0
    %v1018 = vadd.f32 0.0, %v1017
    %v1019 = vpop.f32.mrb[0].mxu0
    %v1020 = vpop.f32.mrb[0].mxu0
    %v1021 = vpop.f32.mrb[0].mxu0
    %1022 = vdwg.mxu0
    %1025 = vrot.lane.b32.xlu0 %v778, 8
    %v1026 = vpop.permute.xlu0 %1025
    %1027 = vrot.lane.b32.xlu0 %v826, 8
    %v1028 = vpop.permute.xlu0 %1027
    %1033 = vrot.lane.b32.xlu0 %v874, 16
    %v1034 = vpop.permute.xlu0 %1033
    %1035 = vrot.lane.b32.xlu0 %v922, 16
    %v1036 = vpop.permute.xlu0 %1035
    %1041 = vrot.lane.b32.xlu0 %v970, 24
    %v1042 = vpop.permute.xlu0 %1041
    %1043 = vrot.lane.b32.xlu0 %v1018, 24
    %v1044 = vpop.permute.xlu0 %1043
    %v1047 = vsel %vm152, %v682, %v1026
    %v1048 = vsel %vm152, %v730, %v1028
    %vm1049 = vcmask 130048
    %v1050 = vsel %vm1049, %v1047, %v1034
    %v1051 = vsel %vm1049, %v1048, %v1036
    %vm1052 = vcmask 195584
    %v1053 = vsel %vm1052, %v1050, %v1042
    %v1054 = vsel %vm1052, %v1051, %v1044
    %v1055 = vpack.c.bf16 %v1054, %v1053
    %v1056 = vld [vmem:[#allocation7] sm:$0xf]
    %v1057 = vld [vmem:[#allocation7 + $0x4] sm:$0xf]
    %v1058 = vld [vmem:[#allocation7 + $0x8] sm:$0xf]
    %v1059 = vld [vmem:[#allocation7 + $0xc] sm:$0xf]
    %v1064 = vunpack.c.l.b16 %v1056
    %v1065 = vunpack.c.l.b16 %v1057
    %v1066 = vunpack.c.l.b16 %v1058
    %v1067 = vunpack.c.l.b16 %v1059
    %v1068 = vpack.c.b16 %v1065, %v1064
    %v1069 = vpack.c.b16 %v1067, %v1066
    %v1073 = vsel %vm76, %v1055, 0
    %1075 = vmatprep.subr.bf16.mxu0 0
    %1076 = vmatpush1.bf16.msra.mxu0 %v1068
    %1077 = vmatprep.subr.bf16.mxu0 0
    %1078 = vmatpush1.bf16.msra.mxu0 %v1069
    %1079 = vmatprep.subr.bf16.mxu0 0
    %1080 = vmatpush1.bf16.msra.mxu0 0
    %1081 = vmatprep.subr.bf16.mxu0 0
    %1082 = vmatpush1.bf16.msra.mxu0 0
    %1083 = vmatprep.subr.bf16.mxu0 0
    %1084 = vmatpush1.bf16.msra.mxu0 0
    %1085 = vmatprep.subr.bf16.mxu0 0
    %1086 = vmatpush1.bf16.msra.mxu0 0
    %1087 = vmatprep.subr.bf16.mxu0 0
    %1088 = vmatpush1.bf16.msra.mxu0 0
    %1089 = vmatprep.subr.bf16.mxu0 0
    %1090 = vmatpush1.bf16.msra.mxu0 0
    %1091 = vmatprep.subr.bf16.mxu0 0
    %1092 = vmatpush1.bf16.msra.mxu0 0
    %1093 = vmatprep.subr.bf16.mxu0 0
    %1094 = vmatpush1.bf16.msra.mxu0 0
    %1095 = vmatprep.subr.bf16.mxu0 0
    %1096 = vmatpush1.bf16.msra.mxu0 0
    %1097 = vmatprep.subr.bf16.mxu0 0
    %1098 = vmatpush1.bf16.msra.mxu0 0
    %1099 = vmatprep.subr.bf16.mxu0 0
    %1100 = vmatpush1.bf16.msra.mxu0 0
    %1101 = vmatprep.subr.bf16.mxu0 0
    %1102 = vmatpush1.bf16.msra.mxu0 0
    %1103 = vmatprep.subr.bf16.mxu0 0
    %1104 = vmatpush1.bf16.msra.mxu0 0
    %1105 = vmatprep.subr.bf16.mxu0 0
    %1106 = vmatpush1.bf16.msra.mxu0 0
    %1107 = vmatprep.mubr.bf16.mxu0 0
    %1108 = vmatmul.mubr.bf16.gmra.mrb[0].mxu0 %v1073
    %v1109 = vpop.f32.mrb[0].mxu0
    %v1110 = vadd.f32 0.0, %v1109
    %v1111 = vpop.f32.mrb[0].mxu0
    %v1112 = vpop.f32.mrb[0].mxu0
    %v1113 = vadd.f32 0.0, %v1112
    %v1114 = vpop.f32.mrb[0].mxu0
    %1115 = vdwg.mxu0
    %1116 = vst [vmem:[#allocation8] sm:$0xff] %v1110
    %1117 = vst [vmem:[#allocation8 + $0x8] sm:$0xff] %v1113
    // Predicated region
    $region26: #{multi_head_attention.1} parent=1 // pred_check
      _
    $region27: #{multi_head_attention.1} parent=1 // pred_check_branch
      %1119 = sbr.rel (0) target = $region29
    $region28: #{multi_head_attention.1} parent=1 // pred_region
      %s1121 = ssub.s32 256, 256
      %1122 = vsyncadd [#allocation4], %s1121
      %s1123 = sshll.u32 [#allocation8], 4
      %s1124 = int_to_ptr.vmem [resolvable:$true] %s1123
      %1129 = dma.vmem_to_hbm [thread:$0]  %s1124, 256, %s3, [#allocation4], 128, 128, 8
    $region29: #{multi_head_attention.1} parent=1 // pred_fallthru
      _
    // Predicated region
    $region30: #{multi_head_attention.1} parent=1 // pred_check
      _
    $region31: #{multi_head_attention.1} parent=1 // pred_check_branch
      %1131 = sbr.rel (0) target = $region33
    $region32: #{multi_head_attention.1} parent=1 // pred_region
      %1132 = dma.done [#allocation4], 256
    $region33: #{multi_head_attention.1} parent=1 // pred_fallthru
      _
    %1133 = vsyncpa [#allocation3], 1
    %1134 = vsyncpa [#allocation6], 1
    %1135 = vsyncpa [#allocation4], 1

</llo_original>
